<compile_context>
chip_gen: v7x
topology: tpu7x:2x2x1
jax: 0.10.0
libtpu: 0.0.40
codegen_flags: <defaults>
</compile_context>

<pallas_src>
import jax
import jax.numpy as jnp
from jax import lax
from jax.experimental import pallas as pl
from jax.experimental.pallas import tpu as pltpu

LANE = 128


def _round_up(x, m):
    return ((x + m - 1) // m) * m


def _ru8(x):
    return _round_up(x, 8)


def _make_actor_kernel(h1, h2, action_dim):
    # Static, sublane-aligned (multiple-of-8) offsets into the packed column.
    o_b1 = 0
    o_b2 = o_b1 + _ru8(h1)
    o_b3 = o_b2 + _ru8(h2)
    o_b4 = o_b3 + _ru8(h1)
    o_sc = o_b4 + _ru8(action_dim)
    o_md = o_sc + _ru8(action_dim)

    # Contract the last dim of both operands: (h, s) x (b, s) -> (h, b).
    nt_dims = (((1,), (1,)), ((), ()))

    def _cast(v, dt):
        return v if v.dtype == dt else v.astype(dt)

    def kernel(s_ref, w1_ref, w2_ref, w3_ref, w4_ref, vec_ref, o_ref):
        w1 = w1_ref[...]          # (h1, S)   resident
        w2 = w2_ref[...]          # (h2, h1)
        w3 = w3_ref[...]          # (h1, h2)
        w4 = w4_ref[...]          # (A,  h1)
        cd = w1.dtype             # compute dtype for MXU operands (f32 or bf16)

        vec = vec_ref[...]        # (Npack, 1) f32; aligned static slices = free views
        b1 = vec[o_b1:o_b1 + h1, :]
        b2 = vec[o_b2:o_b2 + h2, :]
        b3 = vec[o_b3:o_b3 + h1, :]
        b4 = vec[o_b4:o_b4 + action_dim, :]
        scale = vec[o_sc:o_sc + action_dim, :]
        mid = vec[o_md:o_md + action_dim, :]

        x = _cast(s_ref[...], cd)                              # (tb, S)
        # Layer 1: batch moves onto the lane axis -> (h1, tb).
        a = lax.dot_general(w1, x, nt_dims,
                            preferred_element_type=jnp.float32)
        a = jnp.maximum(a + b1, 0.0)
        a = jnp.dot(w2, _cast(a, cd),
                    preferred_element_type=jnp.float32)        # (h2, tb)
        a = jnp.maximum(a + b2, 0.0)
        a = jnp.dot(w3, _cast(a, cd),
                    preferred_element_type=jnp.float32)        # (h1, tb)
        a = jnp.maximum(a + b3, 0.0)
        a = jnp.dot(w4, _cast(a, cd),
                    preferred_element_type=jnp.float32)        # (A, tb)
        a = jnp.tanh(a + b4)
        # lower + (upper - lower) * (a + 1) / 2  ==  a * scale + mid
        o_ref[...] = a * scale + mid

    return kernel


def pack_actor(params, lower, upper, param_dtype=jnp.bfloat16):
    """Pack parameters for the kernel.

    params: (w1,b1,w2,b2,w3,b3,w4,b4) with weights in (in, out) layout and
    biases / bounds as (1, out).  Weights are transposed to (out, in) (MXU
    lhs) and cast to `param_dtype` (bf16 recommended on v5e/v6e/v7x); the six
    small vectors are packed into one f32 column with 8-aligned segments.
    Returns ((w1t, w2t, w3t, w4t, packed_vec), dims).
    """
    w1, b1, w2, b2, w3, b3, w4, b4 = params
    state_dim = int(w1.shape[0])
    h1 = int(w1.shape[1])
    h2 = int(w2.shape[1])
    action_dim = int(w4.shape[1])

    w1t = jnp.asarray(w1.T, param_dtype)
    w2t = jnp.asarray(w2.T, param_dtype)
    w3t = jnp.asarray(w3.T, param_dtype)
    w4t = jnp.asarray(w4.T, param_dtype)

    scale = (upper - lower) * 0.5
    mid = (upper + lower) * 0.5

    segs = [(b1, h1), (b2, h2), (b3, h1),
            (b4, action_dim), (scale, action_dim), (mid, action_dim)]
    cols = []
    for v, n in segs:
        col = jnp.zeros((_ru8(n), 1), jnp.float32)
        col = col.at[:n, 0].set(jnp.asarray(v, jnp.float32).reshape(-1))
        cols.append(col)
    vec = jnp.concatenate(cols, axis=0)

    dims = (state_dim, h1, h2, action_dim)
    return (w1t, w2t, w3t, w4t, vec), dims


def actor_forward(state, packed, dims, *, block_b=2048):
    """state: (B, state_dim) f32 -> (B, action_dim) f32."""
    w1t, w2t, w3t, w4t, vec = packed
    state_dim, h1, h2, action_dim = dims
    B = int(state.shape[0])

    block_b = max(LANE, _round_up(block_b, LANE))
    if B <= LANE:
        tb = B                                     # single full block
    else:
        # Multiple of 128 (lane-dense output tiles, unmasked stores) and
        # >= 2 grid steps so v7x's second TensorCore gets work.
        tb = min(block_b, _round_up((B + 1) // 2, LANE))
    grid = (pl.cdiv(B, tb),)

    kernel = _make_actor_kernel(h1, h2, action_dim)

    flops = 2 * B * (state_dim * h1 + h1 * h2 + h2 * h1 + h1 * action_dim)
    param_bytes = sum(int(w.size) * w.dtype.itemsize
                      for w in (w1t, w2t, w3t, w4t)) + int(vec.size) * 4
    bytes_accessed = 4 * B * state_dim + 4 * B * action_dim + param_bytes

    out = pl.pallas_call(
        kernel,
        out_shape=jax.ShapeDtypeStruct((action_dim, B), jnp.float32),
        grid_spec=pltpu.PrefetchScalarGridSpec(
            num_scalar_prefetch=0,
            grid=grid,
            in_specs=[
                pl.BlockSpec((tb, state_dim), lambda i: (i, 0)),  # streamed tiles
                pl.BlockSpec(w1t.shape, lambda i: (0, 0)),        # resident
                pl.BlockSpec(w2t.shape, lambda i: (0, 0)),        # resident
                pl.BlockSpec(w3t.shape, lambda i: (0, 0)),        # resident
                pl.BlockSpec(w4t.shape, lambda i: (0, 0)),        # resident
                pl.BlockSpec(vec.shape, lambda i: (0, 0)),        # packed vectors
            ],
            out_specs=pl.BlockSpec((action_dim, tb), lambda i: (0, i)),
        ),
        compiler_params=pltpu.CompilerParams(
            dimension_semantics=("parallel",),
        ),
        cost_estimate=pl.CostEstimate(
            flops=flops,
            transcendentals=B * action_dim,
            bytes_accessed=bytes_accessed,
        ),
    )(state, w1t, w2t, w3t, w4t, vec)

    return out.T  # (B, action_dim); tiny (A x B) transpose in the wrapper


def init_actor_params(key, state_dim, action_dim, hidden_dim, hidden_dim2):
    """Mimics the PyTorch module's reset_parameters(): weights ~ U(-1/sqrt(f), 1/sqrt(f))
    with f = weight.size()[0] == out_features; biases keep nn.Linear default
    U(-1/sqrt(in_features), 1/sqrt(in_features)). Weights stored (in, out)."""
    ks = jax.random.split(key, 8)

    def w_init(k, fan_out, shape):  # shape = (in, out)
        lim = 1.0 / jnp.sqrt(jnp.float32(fan_out))
        return jax.random.uniform(k, shape, jnp.float32, -lim, lim)

    def b_init(k, fan_in, out):
        lim = 1.0 / jnp.sqrt(jnp.float32(fan_in))
        return jax.random.uniform(k, (1, out), jnp.float32, -lim, lim)

    w1 = w_init(ks[0], hidden_dim, (state_dim, hidden_dim))
    b1 = b_init(ks[1], state_dim, hidden_dim)
    w2 = w_init(ks[2], hidden_dim2, (hidden_dim, hidden_dim2))
    b2 = b_init(ks[3], hidden_dim, hidden_dim2)
    w3 = w_init(ks[4], hidden_dim, (hidden_dim2, hidden_dim))
    b3 = b_init(ks[5], hidden_dim2, hidden_dim)
    w4 = w_init(ks[6], action_dim, (hidden_dim, action_dim))
    b4 = b_init(ks[7], hidden_dim, action_dim)
    return (w1, b1, w2, b2, w3, b3, w4, b4)


def actor_reference(state, params, lower, upper):
    (w1, b1, w2, b2, w3, b3, w4, b4) = params
    a = jnp.maximum(state @ w1 + b1, 0.0)
    a = jnp.maximum(a @ w2 + b2, 0.0)
    a = jnp.maximum(a @ w3 + b3, 0.0)
    a = jnp.tanh(a @ w4 + b4)
    return lower + (upper - lower) * (a + 1.0) / 2.0


if __name__ == "__main__":
    B, state_dim, hidden_dim, hidden_dim2, action_dim = 8, 8, 32, 64, 2
    max_action = 1.5

    key = jax.random.PRNGKey(0)
    k_params, k_state, k_state2 = jax.random.split(key, 3)

    params = init_actor_params(k_params, state_dim, action_dim, hidden_dim, hidden_dim2)
    upper = jnp.full((1, action_dim), max_action, jnp.float32)
    lower = jnp.full((1, action_dim), -max_action, jnp.float32)

    # f32 parameter path (tight tolerance vs. reference).
    packed_f32, dims = pack_actor(params, lower, upper, param_dtype=jnp.float32)

    # Small batch consistent with the module (single full block, grid=1).
    state = jax.random.normal(k_state, (B, state_dim), jnp.float32)
    out = jax.block_until_ready(actor_forward(state, packed_f32, dims))
    ref = actor_reference(state, params, lower, upper)
    assert out.shape == (B, action_dim)
    assert jnp.allclose(out, ref, atol=1e-5, rtol=1e-5)

    # Larger, non-multiple batch exercising the ragged last block and the
    # >=2-step (megacore-shardable) grid path.
    B2 = 300
    state2 = jax.random.normal(k_state2, (B2, state_dim), jnp.float32)
    out2 = jax.block_until_ready(actor_forward(state2, packed_f32, dims, block_b=256))
    ref2 = actor_reference(state2, params, lower, upper)
    assert out2.shape == (B2, action_dim)
    assert jnp.allclose(out2, ref2, atol=1e-5, rtol=1e-5)

    # bf16-weight path (MXU-native on v5e/v6e/v7x), f32 accumulation / epilogue.
    packed_bf16, _ = pack_actor(params, lower, upper)  # default bf16
    out3 = jax.block_until_ready(actor_forward(state2, packed_bf16, dims))
    assert out3.shape == (B2, action_dim)
    assert jnp.allclose(out3, ref2, atol=5e-2, rtol=5e-2)

    print("KERNEL_OK")
</pallas_src>

<mosaic_0001>
module attributes {stable_mosaic.version = 11 : i64} {
  func.func @kernel(%arg0: i32, %arg1: memref<8x8xf32, #tpu.memory_space<vmem>>, %arg2: memref<32x8xf32, #tpu.memory_space<vmem>>, %arg3: memref<64x32xf32, #tpu.memory_space<vmem>>, %arg4: memref<32x64xf32, #tpu.memory_space<vmem>>, %arg5: memref<2x32xf32, #tpu.memory_space<vmem>>, %arg6: memref<152x1xf32, #tpu.memory_space<vmem>>, %arg7: memref<2x8xf32, #tpu.memory_space<vmem>>) attributes {dimension_semantics = [#tpu.dimension_semantics<parallel>], iteration_bounds = array<i64: 1>, scalar_prefetch = 0 : i64, scratch_operands = 0 : i64, tpu.core_type = #tpu.core_type<tc>, window_params = [{transform_indices = @transform_0, window_bounds = array<i64: 8, 8>}, {pipeline_mode = #tpu.pipeline_mode<synchronous>, transform_indices = @transform_1, window_bounds = array<i64: 32, 8>}, {pipeline_mode = #tpu.pipeline_mode<synchronous>, transform_indices = @transform_2, window_bounds = array<i64: 64, 32>}, {pipeline_mode = #tpu.pipeline_mode<synchronous>, transform_indices = @transform_3, window_bounds = array<i64: 32, 64>}, {pipeline_mode = #tpu.pipeline_mode<synchronous>, transform_indices = @transform_4, window_bounds = array<i64: 2, 32>}, {pipeline_mode = #tpu.pipeline_mode<synchronous>, transform_indices = @transform_5, window_bounds = array<i64: 152, 1>}, {transform_indices = @transform_6, window_bounds = array<i64: 2, 8>}]} {
    %c0 = arith.constant 0 : index
    %c0_0 = arith.constant 0 : index
    %0 = vector.load %arg2[%c0, %c0_0] : memref<32x8xf32, #tpu.memory_space<vmem>>, vector<32x8xf32>
    %c0_1 = arith.constant 0 : index
    %c0_2 = arith.constant 0 : index
    %1 = vector.load %arg3[%c0_1, %c0_2] : memref<64x32xf32, #tpu.memory_space<vmem>>, vector<64x32xf32>
    %c0_3 = arith.constant 0 : index
    %c0_4 = arith.constant 0 : index
    %2 = vector.load %arg4[%c0_3, %c0_4] : memref<32x64xf32, #tpu.memory_space<vmem>>, vector<32x64xf32>
    %c0_5 = arith.constant 0 : index
    %c0_6 = arith.constant 0 : index
    %3 = vector.load %arg5[%c0_5, %c0_6] : memref<2x32xf32, #tpu.memory_space<vmem>>, vector<2x32xf32>
    %c0_7 = arith.constant 0 : index
    %c0_8 = arith.constant 0 : index
    %4 = vector.load %arg6[%c0_7, %c0_8] : memref<152x1xf32, #tpu.memory_space<vmem>>, vector<152x1xf32>
    %5 = vector.extract_strided_slice %4 {offsets = [0, 0], sizes = [32, 1], strides = [1, 1]} : vector<152x1xf32> to vector<32x1xf32>
    %6 = vector.extract_strided_slice %4 {offsets = [32, 0], sizes = [64, 1], strides = [1, 1]} : vector<152x1xf32> to vector<64x1xf32>
    %7 = vector.extract_strided_slice %4 {offsets = [96, 0], sizes = [32, 1], strides = [1, 1]} : vector<152x1xf32> to vector<32x1xf32>
    %8 = vector.extract_strided_slice %4 {offsets = [128, 0], sizes = [2, 1], strides = [1, 1]} : vector<152x1xf32> to vector<2x1xf32>
    %9 = vector.extract_strided_slice %4 {offsets = [136, 0], sizes = [2, 1], strides = [1, 1]} : vector<152x1xf32> to vector<2x1xf32>
    %10 = vector.extract_strided_slice %4 {offsets = [144, 0], sizes = [2, 1], strides = [1, 1]} : vector<152x1xf32> to vector<2x1xf32>
    %c0_9 = arith.constant 0 : index
    %c0_10 = arith.constant 0 : index
    %11 = vector.load %arg1[%c0_9, %c0_10] : memref<8x8xf32, #tpu.memory_space<vmem>>, vector<8x8xf32>
    %cst = arith.constant dense<0.000000e+00> : vector<32x8xf32>
    %12 = tpu.matmul %0, %11, %cst {dimension_numbers = #tpu.dot_dimension_numbers<[1], [1], [0], [0], [0, 0, 1, 0], [], []>} : vector<32x8xf32>, vector<8x8xf32>, vector<32x8xf32> -> vector<32x8xf32>
    %13 = vector.broadcast %5 : vector<32x1xf32> to vector<32x8xf32>
    %14 = arith.addf %12, %13 : vector<32x8xf32>
    %cst_11 = arith.constant 0.000000e+00 : f32
    %15 = vector.broadcast %cst_11 : f32 to vector<32x8xf32>
    %16 = arith.maximumf %14, %15 : vector<32x8xf32>
    %cst_12 = arith.constant dense<0.000000e+00> : vector<64x8xf32>
    %17 = tpu.matmul %1, %16, %cst_12 {dimension_numbers = #tpu.dot_dimension_numbers<[1], [0], [0], [1], [0, 0, 1, 1], [], []>} : vector<64x32xf32>, vector<32x8xf32>, vector<64x8xf32> -> vector<64x8xf32>
    %18 = vector.broadcast %6 : vector<64x1xf32> to vector<64x8xf32>
    %19 = arith.addf %17, %18 : vector<64x8xf32>
    %cst_13 = arith.constant 0.000000e+00 : f32
    %20 = vector.broadcast %cst_13 : f32 to vector<64x8xf32>
    %21 = arith.maximumf %19, %20 : vector<64x8xf32>
    %cst_14 = arith.constant dense<0.000000e+00> : vector<32x8xf32>
    %22 = tpu.matmul %2, %21, %cst_14 {dimension_numbers = #tpu.dot_dimension_numbers<[1], [0], [0], [1], [0, 0, 1, 1], [], []>} : vector<32x64xf32>, vector<64x8xf32>, vector<32x8xf32> -> vector<32x8xf32>
    %23 = vector.broadcast %7 : vector<32x1xf32> to vector<32x8xf32>
    %24 = arith.addf %22, %23 : vector<32x8xf32>
    %cst_15 = arith.constant 0.000000e+00 : f32
    %25 = vector.broadcast %cst_15 : f32 to vector<32x8xf32>
    %26 = arith.maximumf %24, %25 : vector<32x8xf32>
    %cst_16 = arith.constant dense<0.000000e+00> : vector<2x8xf32>
    %27 = tpu.matmul %3, %26, %cst_16 {dimension_numbers = #tpu.dot_dimension_numbers<[1], [0], [0], [1], [0, 0, 1, 1], [], []>} : vector<2x32xf32>, vector<32x8xf32>, vector<2x8xf32> -> vector<2x8xf32>
    %28 = vector.broadcast %8 : vector<2x1xf32> to vector<2x8xf32>
    %29 = arith.addf %27, %28 : vector<2x8xf32>
    %30 = math.tanh %29 : vector<2x8xf32>
    %31 = vector.broadcast %9 : vector<2x1xf32> to vector<2x8xf32>
    %32 = arith.mulf %30, %31 : vector<2x8xf32>
    %33 = vector.broadcast %10 : vector<2x1xf32> to vector<2x8xf32>
    %34 = arith.addf %32, %33 : vector<2x8xf32>
    %c0_17 = arith.constant 0 : index
    %c0_18 = arith.constant 0 : index
    %35 = vector.load %arg7[%c0_17, %c0_18] : memref<2x8xf32, #tpu.memory_space<vmem>>, vector<2x8xf32>
    tpu.vector_store %arg7[%c0_17, %c0_18], %34 {strides = array<i32>} : memref<2x8xf32, #tpu.memory_space<vmem>>, vector<2x8xf32>,
    return
  }
  func.func @transform_0(%arg0: i32) -> (i32, i32) {
    %c0_i32 = arith.constant 0 : i32
    %c0_i32_0 = arith.constant 0 : i32
    return %arg0, %c0_i32 : i32, i32
  }
  func.func @transform_1(%arg0: i32) -> (i32, i32) {
    %c0_i32 = arith.constant 0 : i32
    %c0_i32_0 = arith.constant 0 : i32
    %c0_i32_1 = arith.constant 0 : i32
    return %c0_i32, %c0_i32_0 : i32, i32
  }
  func.func @transform_2(%arg0: i32) -> (i32, i32) {
    %c0_i32 = arith.constant 0 : i32
    %c0_i32_0 = arith.constant 0 : i32
    %c0_i32_1 = arith.constant 0 : i32
    return %c0_i32, %c0_i32_0 : i32, i32
  }
  func.func @transform_3(%arg0: i32) -> (i32, i32) {
    %c0_i32 = arith.constant 0 : i32
    %c0_i32_0 = arith.constant 0 : i32
    %c0_i32_1 = arith.constant 0 : i32
    return %c0_i32, %c0_i32_0 : i32, i32
  }
  func.func @transform_4(%arg0: i32) -> (i32, i32) {
    %c0_i32 = arith.constant 0 : i32
    %c0_i32_0 = arith.constant 0 : i32
    %c0_i32_1 = arith.constant 0 : i32
    return %c0_i32, %c0_i32_0 : i32, i32
  }
  func.func @transform_5(%arg0: i32) -> (i32, i32) {
    %c0_i32 = arith.constant 0 : i32
    %c0_i32_0 = arith.constant 0 : i32
    %c0_i32_1 = arith.constant 0 : i32
    return %c0_i32, %c0_i32_0 : i32, i32
  }
  func.func @transform_6(%arg0: i32) -> (i32, i32) {
    %c0_i32 = arith.constant 0 : i32
    %c0_i32_0 = arith.constant 0 : i32
    return %c0_i32, %arg0 : i32, i32
  }
}

</mosaic_0001>

<llo_original>
// kernel: tpu_custom_call.1
$region0: #{tpu_custom_call.1}
  #allocation0 [shape = 'u32[]', space=smem, size = 0x4, offset = 0x4, fixed_abs, tag = 'smem constant byte address 0x4 - core index']
  #allocation1 [shape = 'u32[144,128]{1,0:T(1,128)}', space=vmem, size = 0x12000, scoped, tag = 'internal scratch']
  %s0 = inlined_call_operand.vmem [shape: f32[8,8], index: 0, kind: input, shape index: {}]
  %s1 = inlined_call_operand.vmem [shape: f32[32,8], index: 1, kind: input, shape index: {}]
  %s2 = inlined_call_operand.vmem [shape: f32[64,32], index: 2, kind: input, shape index: {}]
  %s3 = inlined_call_operand.vmem [shape: f32[32,64], index: 3, kind: input, shape index: {}]
  %s4 = inlined_call_operand.vmem [shape: f32[2,32], index: 4, kind: input, shape index: {}]
  %s5 = inlined_call_operand.vmem [shape: f32[152,1], index: 5, kind: input, shape index: {}]
  %s6 = inlined_call_operand.hbm [shape: f32[2,8], index: 6, kind: output, shape index: {}]
  %s7 = sld [smem:[#allocation0]]
  $region34: #{tpu_custom_call.1} parent=0
    _
  %s9 = ssub.s32 1, %s7
  %s10 = scalar_select 0, %s9, %s7
  $region1: #{tpu_custom_call.1} parent=0
    #allocation2 [shape = 'u8[1024]{0}', space=vmem, size = 0x400, scoped, tag = 'output window, operand 0, single buffered']
    #allocation3 [shape = 's32[1]{0}', space=sflag, size = 0x4, scoped, tag = 'scoped memory for tpu_custom_call.1']
    %11 = vsyncpa [#allocation3], 0
    // Predicated region
    $region2: #{tpu_custom_call.1} parent=1 // pred_check
      _
    $region3: #{tpu_custom_call.1} parent=1 // pred_check_branch
      %13 = sbr.rel (0) target = $region5
    $region4: #{tpu_custom_call.1} parent=1 // pred_region
      _
    $region5: #{tpu_custom_call.1} parent=1 // pred_fallthru
      _
    // Predicated region
    $region6: #{tpu_custom_call.1} parent=1 // pred_check
      _
    $region7: #{tpu_custom_call.1} parent=1 // pred_check_branch
      %15 = sbr.rel (0) target = $region9
    $region8: #{tpu_custom_call.1} parent=1 // pred_region
      _
    $region9: #{tpu_custom_call.1} parent=1 // pred_fallthru
      _
    // Predicated region
    $region10: #{tpu_custom_call.1} parent=1 // pred_check
      _
    $region11: #{tpu_custom_call.1} parent=1 // pred_check_branch
      %17 = sbr.rel (0) target = $region13
    $region12: #{tpu_custom_call.1} parent=1 // pred_region
      _
    $region13: #{tpu_custom_call.1} parent=1 // pred_fallthru
      _
    // Predicated region
    $region14: #{tpu_custom_call.1} parent=1 // pred_check
      _
    $region15: #{tpu_custom_call.1} parent=1 // pred_check_branch
      %19 = sbr.rel (0) target = $region17
    $region16: #{tpu_custom_call.1} parent=1 // pred_region
      _
    $region17: #{tpu_custom_call.1} parent=1 // pred_fallthru
      _
    // Predicated region
    $region18: #{tpu_custom_call.1} parent=1 // pred_check
      _
    $region19: #{tpu_custom_call.1} parent=1 // pred_check_branch
      %21 = sbr.rel (0) target = $region21
    $region20: #{tpu_custom_call.1} parent=1 // pred_region
      _
    $region21: #{tpu_custom_call.1} parent=1 // pred_fallthru
      _
    // Predicated region
    $region22: #{tpu_custom_call.1} parent=1 // pred_check
      _
    $region23: #{tpu_custom_call.1} parent=1 // pred_check_branch
      %23 = sbr.rel (0) target = $region25
    $region24: #{tpu_custom_call.1} parent=1 // pred_region
      _
    $region25: #{tpu_custom_call.1} parent=1 // pred_fallthru
      _
    %v24 = vld [vmem:[%s1] sm:$0xff]
    %v25 = vld [vmem:[%s1 + $0x8] sm:$0xff]
    %v26 = vld [vmem:[%s1 + $0x10] sm:$0xff]
    %v27 = vld [vmem:[%s1 + $0x18] sm:$0xff]
    %v28 = vld [vmem:[%s2] sm:$0xff]
    %v29 = vld [vmem:[%s2 + $0x8] sm:$0xff]
    %v30 = vld [vmem:[%s2 + $0x10] sm:$0xff]
    %v31 = vld [vmem:[%s2 + $0x18] sm:$0xff]
    %v32 = vld [vmem:[%s2 + $0x20] sm:$0xff]
    %v33 = vld [vmem:[%s2 + $0x28] sm:$0xff]
    %v34 = vld [vmem:[%s2 + $0x30] sm:$0xff]
    %v35 = vld [vmem:[%s2 + $0x38] sm:$0xff]
    %v36 = vld [vmem:[%s3] sm:$0xff]
    %v37 = vld [vmem:[%s3 + $0x8] sm:$0xff]
    %v38 = vld [vmem:[%s3 + $0x10] sm:$0xff]
    %v39 = vld [vmem:[%s3 + $0x18] sm:$0xff]
    %v40 = vld [vmem:[%s4] sm:$0x3]
    %v41 = vld [vmem:[%s5] sm:$0xff]
    %v42 = vld [vmem:[%s5 + $0x8] sm:$0xff]
    %v43 = vld [vmem:[%s5 + $0x10] sm:$0xff]
    %v44 = vld [vmem:[%s5 + $0x18] sm:$0xff]
    %v45 = vld [vmem:[%s5 + $0x20] sm:$0xff]
    %v46 = vld [vmem:[%s5 + $0x28] sm:$0xff]
    %v47 = vld [vmem:[%s5 + $0x30] sm:$0xff]
    %v48 = vld [vmem:[%s5 + $0x38] sm:$0xff]
    %v49 = vld [vmem:[%s5 + $0x40] sm:$0xff]
    %v50 = vld [vmem:[%s5 + $0x48] sm:$0xff]
    %v51 = vld [vmem:[%s5 + $0x50] sm:$0xff]
    %v52 = vld [vmem:[%s5 + $0x58] sm:$0xff]
    %v53 = vld [vmem:[%s5 + $0x60] sm:$0xff]
    %v54 = vld [vmem:[%s5 + $0x68] sm:$0xff]
    %v55 = vld [vmem:[%s5 + $0x70] sm:$0xff]
    %v56 = vld [vmem:[%s5 + $0x78] sm:$0xff]
    %v57 = vld [vmem:[%s5 + $0x80] sm:$0xff]
    %v58 = vld [vmem:[%s5 + $0x88] sm:$0xff]
    %v59 = vld [vmem:[%s5 + $0x90] sm:$0xff]
    %v60 = vld [vmem:[%s0] sm:$0xff]
    %62 = vset.pattern.permute.xlu0 0
    %63 = vperm.xlu0 %62, %v41
    %v64 = vpop.permute.xlu0 %63
    %67 = vset.pattern.permute.xlu0 0
    %68 = vperm.xlu0 %67, %v42
    %v69 = vpop.permute.xlu0 %68
    %72 = vset.pattern.permute.xlu0 0
    %73 = vperm.xlu0 %72, %v43
    %v74 = vpop.permute.xlu0 %73
    %77 = vset.pattern.permute.xlu0 0
    %78 = vperm.xlu0 %77, %v44
    %v79 = vpop.permute.xlu0 %78
    %vm81 = vcmask 64512
    %v83 = vsel %vm81, %v24, 0
    %v86 = vsel %vm81, %v25, 0
    %v89 = vsel %vm81, %v26, 0
    %v92 = vsel %vm81, %v27, 0
    %v95 = vsel %vm81, %v60, 0
    %97 = vmatprep.subr.mxu0 0.0
    %98 = vmatpush1.xpose.msra.mxu0 %v95
    %99 = vmatprep.subr.mxu0 0.0
    %100 = vmatpush1.xpose.msra.mxu0 0.0
    %101 = vmatprep.subr.mxu0 0.0
    %102 = vmatpush1.xpose.msra.mxu0 0.0
    %103 = vmatprep.subr.mxu0 0.0
    %104 = vmatpush1.xpose.msra.mxu0 0.0
    %105 = vmatprep.subr.mxu0 0.0
    %106 = vmatpush1.xpose.msra.mxu0 0.0
    %107 = vmatprep.subr.mxu0 0.0
    %108 = vmatpush1.xpose.msra.mxu0 0.0
    %109 = vmatprep.subr.mxu0 0.0
    %110 = vmatpush1.xpose.msra.mxu0 0.0
    %111 = vmatprep.subr.mxu0 0.0
    %112 = vmatpush1.xpose.msra.mxu0 0.0
    %113 = vmatprep.subr.mxu0 0.0
    %114 = vmatpush1.xpose.msra.mxu0 0.0
    %115 = vmatprep.subr.mxu0 0.0
    %116 = vmatpush1.xpose.msra.mxu0 0.0
    %117 = vmatprep.subr.mxu0 0.0
    %118 = vmatpush1.xpose.msra.mxu0 0.0
    %119 = vmatprep.subr.mxu0 0.0
    %120 = vmatpush1.xpose.msra.mxu0 0.0
    %121 = vmatprep.subr.mxu0 0.0
    %122 = vmatpush1.xpose.msra.mxu0 0.0
    %123 = vmatprep.subr.mxu0 0.0
    %124 = vmatpush1.xpose.msra.mxu0 0.0
    %125 = vmatprep.subr.mxu0 0.0
    %126 = vmatpush1.xpose.msra.mxu0 0.0
    %127 = vmatprep.subr.mxu0 0.0
    %128 = vmatpush1.xpose.msra.mxu0 0.0
    %129 = vmatprep.subr.mxu0 0.0
    %130 = vmatpush1.xpose.msra.mxu0 0.0
    %131 = vmatprep.subr.mxu0 0.0
    %132 = vmatpush1.xpose.msra.mxu0 0.0
    %133 = vmatprep.subr.mxu0 0.0
    %134 = vmatpush1.xpose.msra.mxu0 0.0
    %135 = vmatprep.subr.mxu0 0.0
    %136 = vmatpush1.xpose.msra.mxu0 0.0
    %137 = vmatprep.subr.mxu0 0.0
    %138 = vmatpush1.xpose.msra.mxu0 0.0
    %139 = vmatprep.subr.mxu0 0.0
    %140 = vmatpush1.xpose.msra.mxu0 0.0
    %141 = vmatprep.subr.mxu0 0.0
    %142 = vmatpush1.xpose.msra.mxu0 0.0
    %143 = vmatprep.subr.mxu0 0.0
    %144 = vmatpush1.xpose.msra.mxu0 0.0
    %145 = vmatprep.subr.mxu0 0.0
    %146 = vmatpush1.xpose.msra.mxu0 0.0
    %147 = vmatprep.subr.mxu0 0.0
    %148 = vmatpush1.xpose.msra.mxu0 0.0
    %149 = vmatprep.subr.mxu0 0.0
    %150 = vmatpush1.xpose.msra.mxu0 0.0
    %151 = vmatprep.subr.mxu0 0.0
    %152 = vmatpush1.xpose.msra.mxu0 0.0
    %153 = vmatprep.subr.mxu0 0.0
    %154 = vmatpush1.xpose.msra.mxu0 0.0
    %155 = vmatprep.subr.mxu0 0.0
    %156 = vmatpush1.xpose.msra.mxu0 0.0
    %157 = vmatprep.subr.mxu0 0.0
    %158 = vmatpush1.xpose.msra.mxu0 0.0
    %159 = vmatprep.subr.mxu0 0.0
    %160 = vmatpush1.xpose.msra.mxu0 0.0
    %161 = vmatprep.mubr.f32.mxu0 0.0
    %162 = vmatmul.mubr.f32.gmra.mrb[0].mxu0 %v83
    %v163 = vpop.f32.mrb[0].mxu0
    %v164 = vadd.f32 %v64, %v163
    %v165 = vpop.f32.mrb[0].mxu0
    %166 = vmatprep.mubr.f32.mxu0 0.0
    %167 = vmatmul.mubr.f32.gmra.mrb[0].mxu0 %v86
    %v168 = vpop.f32.mrb[0].mxu0
    %v169 = vadd.f32 %v69, %v168
    %v170 = vpop.f32.mrb[0].mxu0
    %171 = vmatprep.mubr.f32.mxu0 0.0
    %172 = vmatmul.mubr.f32.gmra.mrb[0].mxu0 %v89
    %v173 = vpop.f32.mrb[0].mxu0
    %v174 = vadd.f32 %v74, %v173
    %v175 = vpop.f32.mrb[0].mxu0
    %176 = vmatprep.mubr.f32.mxu0 0.0
    %177 = vmatmul.mubr.f32.gmra.mrb[0].mxu0 %v92
    %v178 = vpop.f32.mrb[0].mxu0
    %v179 = vadd.f32 %v79, %v178
    %v180 = vpop.f32.mrb[0].mxu0
    %181 = vdwg.mxu0
    %v182 = vmax.f32 %v164, 0.0
    %v183 = vmax.f32 %v169, 0.0
    %v184 = vmax.f32 %v174, 0.0
    %v185 = vmax.f32 %v179, 0.0
    %187 = vset.pattern.permute.xlu0 0
    %188 = vperm.xlu0 %187, %v45
    %v189 = vpop.permute.xlu0 %188
    %192 = vset.pattern.permute.xlu0 0
    %193 = vperm.xlu0 %192, %v46
    %v194 = vpop.permute.xlu0 %193
    %197 = vset.pattern.permute.xlu0 0
    %198 = vperm.xlu0 %197, %v47
    %v199 = vpop.permute.xlu0 %198
    %202 = vset.pattern.permute.xlu0 0
    %203 = vperm.xlu0 %202, %v48
    %v204 = vpop.permute.xlu0 %203
    %207 = vset.pattern.permute.xlu0 0
    %208 = vperm.xlu0 %207, %v49
    %v209 = vpop.permute.xlu0 %208
    %212 = vset.pattern.permute.xlu0 0
    %213 = vperm.xlu0 %212, %v50
    %v214 = vpop.permute.xlu0 %213
    %217 = vset.pattern.permute.xlu0 0
    %218 = vperm.xlu0 %217, %v51
    %v219 = vpop.permute.xlu0 %218
    %222 = vset.pattern.permute.xlu0 0
    %223 = vperm.xlu0 %222, %v52
    %v224 = vpop.permute.xlu0 %223
    %vm226 = vcmask 261120
    %v228 = vsel %vm226, %v28, 0
    %v231 = vsel %vm226, %v29, 0
    %v234 = vsel %vm226, %v30, 0
    %v237 = vsel %vm226, %v31, 0
    %v240 = vsel %vm226, %v32, 0
    %v243 = vsel %vm226, %v33, 0
    %v246 = vsel %vm226, %v34, 0
    %v249 = vsel %vm226, %v35, 0
    %251 = vmatprep.subr.mxu0 0.0
    %252 = vmatpush1.msra.mxu0 %v182
    %253 = vmatprep.subr.mxu0 0.0
    %254 = vmatpush1.msra.mxu0 %v183
    %255 = vmatprep.subr.mxu0 0.0
    %256 = vmatpush1.msra.mxu0 %v184
    %257 = vmatprep.subr.mxu0 0.0
    %258 = vmatpush1.msra.mxu0 %v185
    %259 = vmatprep.subr.mxu0 0.0
    %260 = vmatpush1.msra.mxu0 0.0
    %261 = vmatprep.subr.mxu0 0.0
    %262 = vmatpush1.msra.mxu0 0.0
    %263 = vmatprep.subr.mxu0 0.0
    %264 = vmatpush1.msra.mxu0 0.0
    %265 = vmatprep.subr.mxu0 0.0
    %266 = vmatpush1.msra.mxu0 0.0
    %267 = vmatprep.subr.mxu0 0.0
    %268 = vmatpush1.msra.mxu0 0.0
    %269 = vmatprep.subr.mxu0 0.0
    %270 = vmatpush1.msra.mxu0 0.0
    %271 = vmatprep.subr.mxu0 0.0
    %272 = vmatpush1.msra.mxu0 0.0
    %273 = vmatprep.subr.mxu0 0.0
    %274 = vmatpush1.msra.mxu0 0.0
    %275 = vmatprep.subr.mxu0 0.0
    %276 = vmatpush1.msra.mxu0 0.0
    %277 = vmatprep.subr.mxu0 0.0
    %278 = vmatpush1.msra.mxu0 0.0
    %279 = vmatprep.subr.mxu0 0.0
    %280 = vmatpush1.msra.mxu0 0.0
    %281 = vmatprep.subr.mxu0 0.0
    %282 = vmatpush1.msra.mxu0 0.0
    %283 = vmatprep.subr.mxu0 0.0
    %284 = vmatpush1.msra.mxu0 0.0
    %285 = vmatprep.subr.mxu0 0.0
    %286 = vmatpush1.msra.mxu0 0.0
    %287 = vmatprep.subr.mxu0 0.0
    %288 = vmatpush1.msra.mxu0 0.0
    %289 = vmatprep.subr.mxu0 0.0
    %290 = vmatpush1.msra.mxu0 0.0
    %291 = vmatprep.subr.mxu0 0.0
    %292 = vmatpush1.msra.mxu0 0.0
    %293 = vmatprep.subr.mxu0 0.0
    %294 = vmatpush1.msra.mxu0 0.0
    %295 = vmatprep.subr.mxu0 0.0
    %296 = vmatpush1.msra.mxu0 0.0
    %297 = vmatprep.subr.mxu0 0.0
    %298 = vmatpush1.msra.mxu0 0.0
    %299 = vmatprep.subr.mxu0 0.0
    %300 = vmatpush1.msra.mxu0 0.0
    %301 = vmatprep.subr.mxu0 0.0
    %302 = vmatpush1.msra.mxu0 0.0
    %303 = vmatprep.subr.mxu0 0.0
    %304 = vmatpush1.msra.mxu0 0.0
    %305 = vmatprep.subr.mxu0 0.0
    %306 = vmatpush1.msra.mxu0 0.0
    %307 = vmatprep.subr.mxu0 0.0
    %308 = vmatpush1.msra.mxu0 0.0
    %309 = vmatprep.subr.mxu0 0.0
    %310 = vmatpush1.msra.mxu0 0.0
    %311 = vmatprep.subr.mxu0 0.0
    %312 = vmatpush1.msra.mxu0 0.0
    %313 = vmatprep.subr.mxu0 0.0
    %314 = vmatpush1.msra.mxu0 0.0
    %315 = vmatprep.mubr.f32.mxu0 0.0
    %316 = vmatmul.mubr.f32.gmra.mrb[0].mxu0 %v228
    %v317 = vpop.f32.mrb[0].mxu0
    %v318 = vadd.f32 %v189, %v317
    %v319 = vpop.f32.mrb[0].mxu0
    %320 = vmatprep.mubr.f32.mxu0 0.0
    %321 = vmatmul.mubr.f32.gmra.mrb[0].mxu0 %v231
    %v322 = vpop.f32.mrb[0].mxu0
    %v323 = vadd.f32 %v194, %v322
    %v324 = vpop.f32.mrb[0].mxu0
    %325 = vmatprep.mubr.f32.mxu0 0.0
    %326 = vmatmul.mubr.f32.gmra.mrb[0].mxu0 %v234
    %v327 = vpop.f32.mrb[0].mxu0
    %v328 = vadd.f32 %v199, %v327
    %v329 = vpop.f32.mrb[0].mxu0
    %330 = vmatprep.mubr.f32.mxu0 0.0
    %331 = vmatmul.mubr.f32.gmra.mrb[0].mxu0 %v237
    %v332 = vpop.f32.mrb[0].mxu0
    %v333 = vadd.f32 %v204, %v332
    %v334 = vpop.f32.mrb[0].mxu0
    %335 = vmatprep.mubr.f32.mxu0 0.0
    %336 = vmatmul.mubr.f32.gmra.mrb[0].mxu0 %v240
    %v337 = vpop.f32.mrb[0].mxu0
    %v338 = vadd.f32 %v209, %v337
    %v339 = vpop.f32.mrb[0].mxu0
    %340 = vmatprep.mubr.f32.mxu0 0.0
    %341 = vmatmul.mubr.f32.gmra.mrb[0].mxu0 %v243
    %v342 = vpop.f32.mrb[0].mxu0
    %v343 = vadd.f32 %v214, %v342
    %v344 = vpop.f32.mrb[0].mxu0
    %345 = vmatprep.mubr.f32.mxu0 0.0
    %346 = vmatmul.mubr.f32.gmra.mrb[0].mxu0 %v246
    %v347 = vpop.f32.mrb[0].mxu0
    %v348 = vadd.f32 %v219, %v347
    %v349 = vpop.f32.mrb[0].mxu0
    %350 = vmatprep.mubr.f32.mxu0 0.0
    %351 = vmatmul.mubr.f32.gmra.mrb[0].mxu0 %v249
    %v352 = vpop.f32.mrb[0].mxu0
    %v353 = vadd.f32 %v224, %v352
    %v354 = vpop.f32.mrb[0].mxu0
    %355 = vdwg.mxu0
    %v356 = vmax.f32 %v318, 0.0
    %v357 = vmax.f32 %v323, 0.0
    %v358 = vmax.f32 %v328, 0.0
    %v359 = vmax.f32 %v333, 0.0
    %v360 = vmax.f32 %v338, 0.0
    %v361 = vmax.f32 %v343, 0.0
    %v362 = vmax.f32 %v348, 0.0
    %v363 = vmax.f32 %v353, 0.0
    %365 = vset.pattern.permute.xlu0 0
    %366 = vperm.xlu0 %365, %v53
    %v367 = vpop.permute.xlu0 %366
    %370 = vset.pattern.permute.xlu0 0
    %371 = vperm.xlu0 %370, %v54
    %v372 = vpop.permute.xlu0 %371
    %375 = vset.pattern.permute.xlu0 0
    %376 = vperm.xlu0 %375, %v55
    %v377 = vpop.permute.xlu0 %376
    %380 = vset.pattern.permute.xlu0 0
    %381 = vperm.xlu0 %380, %v56
    %v382 = vpop.permute.xlu0 %381
    %vm384 = vcmask 523264
    %v386 = vsel %vm384, %v36, 0
    %v389 = vsel %vm384, %v37, 0
    %v392 = vsel %vm384, %v38, 0
    %v395 = vsel %vm384, %v39, 0
    %397 = vmatprep.subr.mxu0 0.0
    %398 = vmatpush1.msra.mxu0 %v356
    %399 = vmatprep.subr.mxu0 0.0
    %400 = vmatpush1.msra.mxu0 %v357
    %401 = vmatprep.subr.mxu0 0.0
    %402 = vmatpush1.msra.mxu0 %v358
    %403 = vmatprep.subr.mxu0 0.0
    %404 = vmatpush1.msra.mxu0 %v359
    %405 = vmatprep.subr.mxu0 0.0
    %406 = vmatpush1.msra.mxu0 %v360
    %407 = vmatprep.subr.mxu0 0.0
    %408 = vmatpush1.msra.mxu0 %v361
    %409 = vmatprep.subr.mxu0 0.0
    %410 = vmatpush1.msra.mxu0 %v362
    %411 = vmatprep.subr.mxu0 0.0
    %412 = vmatpush1.msra.mxu0 %v363
    %413 = vmatprep.subr.mxu0 0.0
    %414 = vmatpush1.msra.mxu0 0.0
    %415 = vmatprep.subr.mxu0 0.0
    %416 = vmatpush1.msra.mxu0 0.0
    %417 = vmatprep.subr.mxu0 0.0
    %418 = vmatpush1.msra.mxu0 0.0
    %419 = vmatprep.subr.mxu0 0.0
    %420 = vmatpush1.msra.mxu0 0.0
    %421 = vmatprep.subr.mxu0 0.0
    %422 = vmatpush1.msra.mxu0 0.0
    %423 = vmatprep.subr.mxu0 0.0
    %424 = vmatpush1.msra.mxu0 0.0
    %425 = vmatprep.subr.mxu0 0.0
    %426 = vmatpush1.msra.mxu0 0.0
    %427 = vmatprep.subr.mxu0 0.0
    %428 = vmatpush1.msra.mxu0 0.0
    %429 = vmatprep.subr.mxu0 0.0
    %430 = vmatpush1.msra.mxu0 0.0
    %431 = vmatprep.subr.mxu0 0.0
    %432 = vmatpush1.msra.mxu0 0.0
    %433 = vmatprep.subr.mxu0 0.0
    %434 = vmatpush1.msra.mxu0 0.0
    %435 = vmatprep.subr.mxu0 0.0
    %436 = vmatpush1.msra.mxu0 0.0
    %437 = vmatprep.subr.mxu0 0.0
    %438 = vmatpush1.msra.mxu0 0.0
    %439 = vmatprep.subr.mxu0 0.0
    %440 = vmatpush1.msra.mxu0 0.0
    %441 = vmatprep.subr.mxu0 0.0
    %442 = vmatpush1.msra.mxu0 0.0
    %443 = vmatprep.subr.mxu0 0.0
    %444 = vmatpush1.msra.mxu0 0.0
    %445 = vmatprep.subr.mxu0 0.0
    %446 = vmatpush1.msra.mxu0 0.0
    %447 = vmatprep.subr.mxu0 0.0
    %448 = vmatpush1.msra.mxu0 0.0
    %449 = vmatprep.subr.mxu0 0.0
    %450 = vmatpush1.msra.mxu0 0.0
    %451 = vmatprep.subr.mxu0 0.0
    %452 = vmatpush1.msra.mxu0 0.0
    %453 = vmatprep.subr.mxu0 0.0
    %454 = vmatpush1.msra.mxu0 0.0
    %455 = vmatprep.subr.mxu0 0.0
    %456 = vmatpush1.msra.mxu0 0.0
    %457 = vmatprep.subr.mxu0 0.0
    %458 = vmatpush1.msra.mxu0 0.0
    %459 = vmatprep.subr.mxu0 0.0
    %460 = vmatpush1.msra.mxu0 0.0
    %461 = vmatprep.mubr.f32.mxu0 0.0
    %462 = vmatmul.mubr.f32.gmra.mrb[0].mxu0 %v386
    %v463 = vpop.f32.mrb[0].mxu0
    %v464 = vadd.f32 %v367, %v463
    %v465 = vpop.f32.mrb[0].mxu0
    %466 = vmatprep.mubr.f32.mxu0 0.0
    %467 = vmatmul.mubr.f32.gmra.mrb[0].mxu0 %v389
    %v468 = vpop.f32.mrb[0].mxu0
    %v469 = vadd.f32 %v372, %v468
    %v470 = vpop.f32.mrb[0].mxu0
    %471 = vmatprep.mubr.f32.mxu0 0.0
    %472 = vmatmul.mubr.f32.gmra.mrb[0].mxu0 %v392
    %v473 = vpop.f32.mrb[0].mxu0
    %v474 = vadd.f32 %v377, %v473
    %v475 = vpop.f32.mrb[0].mxu0
    %476 = vmatprep.mubr.f32.mxu0 0.0
    %477 = vmatmul.mubr.f32.gmra.mrb[0].mxu0 %v395
    %v478 = vpop.f32.mrb[0].mxu0
    %v479 = vadd.f32 %v382, %v478
    %v480 = vpop.f32.mrb[0].mxu0
    %481 = vdwg.mxu0
    %v482 = vmax.f32 %v464, 0.0
    %v483 = vmax.f32 %v469, 0.0
    %v484 = vmax.f32 %v474, 0.0
    %v485 = vmax.f32 %v479, 0.0
    %487 = vset.pattern.permute.xlu0 0
    %488 = vperm.xlu0 %487, %v57
    %v489 = vpop.permute.xlu0 %488
    %v492 = vsel %vm226, %v40, 0
    %494 = vmatprep.subr.mxu0 0.0
    %495 = vmatpush1.msra.mxu0 %v482
    %496 = vmatprep.subr.mxu0 0.0
    %497 = vmatpush1.msra.mxu0 %v483
    %498 = vmatprep.subr.mxu0 0.0
    %499 = vmatpush1.msra.mxu0 %v484
    %500 = vmatprep.subr.mxu0 0.0
    %501 = vmatpush1.msra.mxu0 %v485
    %502 = vmatprep.subr.mxu0 0.0
    %503 = vmatpush1.msra.mxu0 0.0
    %504 = vmatprep.subr.mxu0 0.0
    %505 = vmatpush1.msra.mxu0 0.0
    %506 = vmatprep.subr.mxu0 0.0
    %507 = vmatpush1.msra.mxu0 0.0
    %508 = vmatprep.subr.mxu0 0.0
    %509 = vmatpush1.msra.mxu0 0.0
    %510 = vmatprep.subr.mxu0 0.0
    %511 = vmatpush1.msra.mxu0 0.0
    %512 = vmatprep.subr.mxu0 0.0
    %513 = vmatpush1.msra.mxu0 0.0
    %514 = vmatprep.subr.mxu0 0.0
    %515 = vmatpush1.msra.mxu0 0.0
    %516 = vmatprep.subr.mxu0 0.0
    %517 = vmatpush1.msra.mxu0 0.0
    %518 = vmatprep.subr.mxu0 0.0
    %519 = vmatpush1.msra.mxu0 0.0
    %520 = vmatprep.subr.mxu0 0.0
    %521 = vmatpush1.msra.mxu0 0.0
    %522 = vmatprep.subr.mxu0 0.0
    %523 = vmatpush1.msra.mxu0 0.0
    %524 = vmatprep.subr.mxu0 0.0
    %525 = vmatpush1.msra.mxu0 0.0
    %526 = vmatprep.subr.mxu0 0.0
    %527 = vmatpush1.msra.mxu0 0.0
    %528 = vmatprep.subr.mxu0 0.0
    %529 = vmatpush1.msra.mxu0 0.0
    %530 = vmatprep.subr.mxu0 0.0
    %531 = vmatpush1.msra.mxu0 0.0
    %532 = vmatprep.subr.mxu0 0.0
    %533 = vmatpush1.msra.mxu0 0.0
    %534 = vmatprep.subr.mxu0 0.0
    %535 = vmatpush1.msra.mxu0 0.0
    %536 = vmatprep.subr.mxu0 0.0
    %537 = vmatpush1.msra.mxu0 0.0
    %538 = vmatprep.subr.mxu0 0.0
    %539 = vmatpush1.msra.mxu0 0.0
    %540 = vmatprep.subr.mxu0 0.0
    %541 = vmatpush1.msra.mxu0 0.0
    %542 = vmatprep.subr.mxu0 0.0
    %543 = vmatpush1.msra.mxu0 0.0
    %544 = vmatprep.subr.mxu0 0.0
    %545 = vmatpush1.msra.mxu0 0.0
    %546 = vmatprep.subr.mxu0 0.0
    %547 = vmatpush1.msra.mxu0 0.0
    %548 = vmatprep.subr.mxu0 0.0
    %549 = vmatpush1.msra.mxu0 0.0
    %550 = vmatprep.subr.mxu0 0.0
    %551 = vmatpush1.msra.mxu0 0.0
    %552 = vmatprep.subr.mxu0 0.0
    %553 = vmatpush1.msra.mxu0 0.0
    %554 = vmatprep.subr.mxu0 0.0
    %555 = vmatpush1.msra.mxu0 0.0
    %556 = vmatprep.subr.mxu0 0.0
    %557 = vmatpush1.msra.mxu0 0.0
    %558 = vmatprep.mubr.f32.mxu0 0.0
    %559 = vmatmul.mubr.f32.gmra.mrb[0].mxu0 %v492
    %v560 = vpop.f32.mrb[0].mxu0
    %v561 = vadd.f32 %v489, %v560
    %v562 = vpop.f32.mrb[0].mxu0
    %563 = vdwg.mxu0
    %v564 = vtanh.pop %v561
    %566 = vset.pattern.permute.xlu0 0
    %567 = vperm.xlu0 %566, %v58
    %v568 = vpop.permute.xlu0 %567
    %v570 = vmul.f32 %v564, %v568
    %572 = vset.pattern.permute.xlu0 0
    %573 = vperm.xlu0 %572, %v59
    %v574 = vpop.permute.xlu0 %573
    %v576 = vadd.f32 %v570, %v574
    %vm577 = vcmask 58368
    %578 = vst.msk [vmem:[#allocation2] sm:$0x3] %vm577, %v576
    // Predicated region
    $region26: #{tpu_custom_call.1} parent=1 // pred_check
      _
    $region27: #{tpu_custom_call.1} parent=1 // pred_check_branch
      %580 = sbr.rel (0) target = $region29
    $region28: #{tpu_custom_call.1} parent=1 // pred_region
      %s582 = ssub.s32 32, 32
      %583 = vsyncadd [#allocation3], %s582
      %s585 = sshll.u32 [#allocation2], 4
      %s586 = int_to_ptr.vmem [resolvable:$true] %s585
      %588 = dma.vmem_to_hbm [thread:$0]  %s586, 32, %s6, [#allocation3]
    $region29: #{tpu_custom_call.1} parent=1 // pred_fallthru
      _
    // Predicated region
    $region30: #{tpu_custom_call.1} parent=1 // pred_check
      _
    $region31: #{tpu_custom_call.1} parent=1 // pred_check_branch
      %590 = sbr.rel (0) target = $region33
    $region32: #{tpu_custom_call.1} parent=1 // pred_region
      %591 = dma.done [#allocation3], 32
    $region33: #{tpu_custom_call.1} parent=1 // pred_fallthru
      _
    %592 = vsyncpa [#allocation3], 1

</llo_original>
